<compile_context>
chip_gen: v6e
topology: v6e:2x2x1
jax: 0.10.0
libtpu: 0.0.40
codegen_flags: <defaults>
</compile_context>

<pallas_src>
import functools

import jax
import jax.numpy as jnp
from jax.experimental import pallas as pl
from jax.experimental.pallas import tpu as pltpu

INPUT_DIM = 30
DIMS = [INPUT_DIM, 128, 64, 32, 16, 1]
EPS = 1e-5


def _mlp_kernel(x_ref,
                w1, b1, w2, b2, w3, b3, w4, b4, w5, b5,
                o_ref):
    """Fused 5-layer MLP: (linear[BN-folded] -> relu) x4 -> linear."""
    h = x_ref[...]  # (BLOCK_B, 30) float32

    def layer(h, w_ref, b_ref, relu):
        # bf16 MXU operands, f32 accumulate; bias/ReLU on the VPU in f32.
        y = jnp.dot(h.astype(jnp.bfloat16), w_ref[...],
                    preferred_element_type=jnp.float32) + b_ref[...]
        return jnp.maximum(y, 0.0) if relu else y

    h = layer(h, w1, b1, True)    # fc1 + bn1 + relu   (dropout1 = identity)
    h = layer(h, w2, b2, True)    # fc2 + bn2 + relu   (dropout2 = identity)
    h = layer(h, w3, b3, True)    # fc3 + bn3 + relu   (dropout3 = identity)
    h = layer(h, w4, b4, True)    # fc4 + bn4 + relu   (dropout4 = identity)
    o_ref[...] = layer(h, w5, b5, False)   # fc5, no activation

    # TODO(synk): training-mode Dropout / batch-statistics BatchNorm not
    # implemented (inference semantics only).


def init_params(key):
    """Deterministic params mirroring the PyTorch module, BN folded into w/b."""
    params = {}
    for li in range(1, 6):
        fan_in, fan_out = DIMS[li - 1], DIMS[li]
        key, kw, kb = jax.random.split(key, 3)
        bound = 1.0 / jnp.sqrt(fan_in)
        # stored (in, out): transpose of PyTorch's (out, in) Linear weight
        w = jax.random.uniform(kw, (fan_in, fan_out), jnp.float32, -bound, bound)
        b = jax.random.uniform(kb, (fan_out,), jnp.float32, -bound, bound)
        if li <= 4:  # BatchNorm1d after fc1..fc4 (eval mode, running stats)
            key, kg, kbeta, km, kv = jax.random.split(key, 5)
            gamma = 1.0 + 0.1 * jax.random.normal(kg, (fan_out,), jnp.float32)
            beta = 0.1 * jax.random.normal(kbeta, (fan_out,), jnp.float32)
            r_mean = 0.1 * jax.random.normal(km, (fan_out,), jnp.float32)
            r_var = 1.0 + 0.1 * jax.random.uniform(kv, (fan_out,), jnp.float32)
            scale = gamma / jnp.sqrt(r_var + EPS)        # (out,)
            shift = beta - r_mean * scale
            w = w * scale[None, :]                       # fold BN into Linear
            b = b * scale + shift
        params[f"w{li}"] = w.astype(jnp.bfloat16)        # MXU operand dtype
        params[f"b{li}"] = b.reshape(1, fan_out)         # f32, VPU add
    return params


def _round_up(x, m):
    return (x + m - 1) // m * m


@functools.partial(jax.jit, static_argnames=("block_b",))
def _net_forward_padded(x_pad, params, block_b):
    Bp = x_pad.shape[0]
    grid = (Bp // block_b,)

    def const_spec(arr):
        # full-array block, constant index -> pinned in VMEM across grid steps
        return pl.BlockSpec(arr.shape, lambda i: (0,) * arr.ndim)

    args = [x_pad]
    in_specs = [pl.BlockSpec((block_b, INPUT_DIM), lambda i: (i, 0))]
    for li in range(1, 6):
        for name in (f"w{li}", f"b{li}"):
            arr = params[name]
            args.append(arr)
            in_specs.append(const_spec(arr))

    flops = 2 * Bp * sum(DIMS[i] * DIMS[i + 1] for i in range(5))
    param_bytes = sum(int(a.size) * a.dtype.itemsize for a in args[1:])
    cost = pl.CostEstimate(
        flops=flops,
        transcendentals=0,
        bytes_accessed=4 * Bp * (INPUT_DIM + 1) + param_bytes,
    )

    return pl.pallas_call(
        _mlp_kernel,
        out_shape=jax.ShapeDtypeStruct((Bp, 1), jnp.float32),
        grid=grid,
        in_specs=in_specs,
        out_specs=pl.BlockSpec((block_b, 1), lambda i: (i, 0)),
        compiler_params=pltpu.CompilerParams(
            dimension_semantics=("parallel",)),
        cost_estimate=cost,
    )(*args)


def net_forward(x, params, block_b=1024):
    """Batch-blocked forward pass; handles any batch size by padding."""
    B = x.shape[0]
    # batch tile: multiple of 8 (f32 sublane), capped to bound per-step VMEM
    bb = min(block_b, _round_up(B, 8))
    Bp = _round_up(B, bb)
    if Bp != B:
        x = jnp.pad(x, ((0, Bp - B), (0, 0)))
    out = _net_forward_padded(x, params, bb)
    return out[:B]


def _ref_forward(x, params):
    """Pure-JAX reference with identical bf16-operand / f32-accumulate numerics."""
    h = x
    for li in range(1, 6):
        h = jnp.dot(h.astype(jnp.bfloat16), params[f"w{li}"],
                    preferred_element_type=jnp.float32) + params[f"b{li}"]
        if li < 5:
            h = jnp.maximum(h, 0.0)
    return h


if __name__ == "__main__":
    key = jax.random.PRNGKey(0)
    key, kx = jax.random.split(key)
    params = init_params(key)

    batch = 8
    x = jax.random.normal(kx, (batch, INPUT_DIM), jnp.float32)
    out = net_forward(x, params)
    jax.block_until_ready(out)
    assert out.shape == (batch, 1), out.shape
    ref = _ref_forward(x, params)
    assert jnp.allclose(out, ref, atol=1e-3, rtol=1e-3), (
        float(jnp.max(jnp.abs(out - ref))))

    # exercise the batch-grid + tail-padding path (B not a multiple of block_b)
    key, kx2 = jax.random.split(key)
    x2 = jax.random.normal(kx2, (300, INPUT_DIM), jnp.float32)
    out2 = net_forward(x2, params, block_b=128)
    jax.block_until_ready(out2)
    assert out2.shape == (300, 1), out2.shape
    assert jnp.allclose(out2, _ref_forward(x2, params), atol=1e-3, rtol=1e-3)

    print("KERNEL_OK")
</pallas_src>

<mosaic_0001>
module attributes {stable_mosaic.version = 11 : i64} {
  func.func @_mlp_kernel(%arg0: i32, %arg1: memref<8x30xf32, #tpu.memory_space<vmem>>, %arg2: memref<30x128xbf16, #tpu.memory_space<vmem>>, %arg3: memref<1x128xf32, #tpu.memory_space<vmem>>, %arg4: memref<128x64xbf16, #tpu.memory_space<vmem>>, %arg5: memref<1x64xf32, #tpu.memory_space<vmem>>, %arg6: memref<64x32xbf16, #tpu.memory_space<vmem>>, %arg7: memref<1x32xf32, #tpu.memory_space<vmem>>, %arg8: memref<32x16xbf16, #tpu.memory_space<vmem>>, %arg9: memref<1x16xf32, #tpu.memory_space<vmem>>, %arg10: memref<16x1xbf16, #tpu.memory_space<vmem>>, %arg11: memref<1x1xf32, #tpu.memory_space<vmem>>, %arg12: memref<8x1xf32, #tpu.memory_space<vmem>>) attributes {dimension_semantics = [#tpu.dimension_semantics<parallel>], iteration_bounds = array<i64: 1>, scalar_prefetch = 0 : i64, scratch_operands = 0 : i64, tpu.core_type = #tpu.core_type<tc>, window_params = [{transform_indices = @transform_0, window_bounds = array<i64: 8, 30>}, {pipeline_mode = #tpu.pipeline_mode<synchronous>, transform_indices = @transform_1, window_bounds = array<i64: 30, 128>}, {pipeline_mode = #tpu.pipeline_mode<synchronous>, transform_indices = @transform_2, window_bounds = array<i64: 1, 128>}, {pipeline_mode = #tpu.pipeline_mode<synchronous>, transform_indices = @transform_3, window_bounds = array<i64: 128, 64>}, {pipeline_mode = #tpu.pipeline_mode<synchronous>, transform_indices = @transform_4, window_bounds = array<i64: 1, 64>}, {pipeline_mode = #tpu.pipeline_mode<synchronous>, transform_indices = @transform_5, window_bounds = array<i64: 64, 32>}, {pipeline_mode = #tpu.pipeline_mode<synchronous>, transform_indices = @transform_6, window_bounds = array<i64: 1, 32>}, {pipeline_mode = #tpu.pipeline_mode<synchronous>, transform_indices = @transform_7, window_bounds = array<i64: 32, 16>}, {pipeline_mode = #tpu.pipeline_mode<synchronous>, transform_indices = @transform_8, window_bounds = array<i64: 1, 16>}, {pipeline_mode = #tpu.pipeline_mode<synchronous>, transform_indices = @transform_9, window_bounds = array<i64: 16, 1>}, {pipeline_mode = #tpu.pipeline_mode<synchronous>, transform_indices = @transform_10, window_bounds = array<i64: 1, 1>}, {transform_indices = @transform_11, window_bounds = array<i64: 8, 1>}]} {
    %c0 = arith.constant 0 : index
    %c0_0 = arith.constant 0 : index
    %0 = vector.load %arg1[%c0, %c0_0] : memref<8x30xf32, #tpu.memory_space<vmem>>, vector<8x30xf32>
    %1 = arith.truncf %0 : vector<8x30xf32> to vector<8x30xbf16>
    %c0_1 = arith.constant 0 : index
    %c0_2 = arith.constant 0 : index
    %2 = vector.load %arg2[%c0_1, %c0_2] : memref<30x128xbf16, #tpu.memory_space<vmem>>, vector<30x128xbf16>
    %cst = arith.constant dense<0.000000e+00> : vector<8x128xf32>
    %3 = tpu.matmul %1, %2, %cst {dimension_numbers = #tpu.dot_dimension_numbers<[1], [0], [0], [1], [0, 0, 1, 1], [], []>} : vector<8x30xbf16>, vector<30x128xbf16>, vector<8x128xf32> -> vector<8x128xf32>
    %c0_3 = arith.constant 0 : index
    %c0_4 = arith.constant 0 : index
    %4 = vector.load %arg3[%c0_3, %c0_4] : memref<1x128xf32, #tpu.memory_space<vmem>>, vector<1x128xf32>
    %5 = vector.broadcast %4 : vector<1x128xf32> to vector<8x128xf32>
    %6 = arith.addf %3, %5 : vector<8x128xf32>
    %cst_5 = arith.constant 0.000000e+00 : f32
    %7 = vector.broadcast %cst_5 : f32 to vector<8x128xf32>
    %8 = arith.maximumf %6, %7 : vector<8x128xf32>
    %9 = arith.truncf %8 : vector<8x128xf32> to vector<8x128xbf16>
    %c0_6 = arith.constant 0 : index
    %c0_7 = arith.constant 0 : index
    %10 = vector.load %arg4[%c0_6, %c0_7] : memref<128x64xbf16, #tpu.memory_space<vmem>>, vector<128x64xbf16>
    %cst_8 = arith.constant dense<0.000000e+00> : vector<8x64xf32>
    %11 = tpu.matmul %9, %10, %cst_8 {dimension_numbers = #tpu.dot_dimension_numbers<[1], [0], [0], [1], [0, 0, 1, 1], [], []>} : vector<8x128xbf16>, vector<128x64xbf16>, vector<8x64xf32> -> vector<8x64xf32>
    %c0_9 = arith.constant 0 : index
    %c0_10 = arith.constant 0 : index
    %12 = vector.load %arg5[%c0_9, %c0_10] : memref<1x64xf32, #tpu.memory_space<vmem>>, vector<1x64xf32>
    %13 = vector.broadcast %12 : vector<1x64xf32> to vector<8x64xf32>
    %14 = arith.addf %11, %13 : vector<8x64xf32>
    %cst_11 = arith.constant 0.000000e+00 : f32
    %15 = vector.broadcast %cst_11 : f32 to vector<8x64xf32>
    %16 = arith.maximumf %14, %15 : vector<8x64xf32>
    %17 = arith.truncf %16 : vector<8x64xf32> to vector<8x64xbf16>
    %c0_12 = arith.constant 0 : index
    %c0_13 = arith.constant 0 : index
    %18 = vector.load %arg6[%c0_12, %c0_13] : memref<64x32xbf16, #tpu.memory_space<vmem>>, vector<64x32xbf16>
    %cst_14 = arith.constant dense<0.000000e+00> : vector<8x32xf32>
    %19 = tpu.matmul %17, %18, %cst_14 {dimension_numbers = #tpu.dot_dimension_numbers<[1], [0], [0], [1], [0, 0, 1, 1], [], []>} : vector<8x64xbf16>, vector<64x32xbf16>, vector<8x32xf32> -> vector<8x32xf32>
    %c0_15 = arith.constant 0 : index
    %c0_16 = arith.constant 0 : index
    %20 = vector.load %arg7[%c0_15, %c0_16] : memref<1x32xf32, #tpu.memory_space<vmem>>, vector<1x32xf32>
    %21 = vector.broadcast %20 : vector<1x32xf32> to vector<8x32xf32>
    %22 = arith.addf %19, %21 : vector<8x32xf32>
    %cst_17 = arith.constant 0.000000e+00 : f32
    %23 = vector.broadcast %cst_17 : f32 to vector<8x32xf32>
    %24 = arith.maximumf %22, %23 : vector<8x32xf32>
    %25 = arith.truncf %24 : vector<8x32xf32> to vector<8x32xbf16>
    %c0_18 = arith.constant 0 : index
    %c0_19 = arith.constant 0 : index
    %26 = vector.load %arg8[%c0_18, %c0_19] : memref<32x16xbf16, #tpu.memory_space<vmem>>, vector<32x16xbf16>
    %cst_20 = arith.constant dense<0.000000e+00> : vector<8x16xf32>
    %27 = tpu.matmul %25, %26, %cst_20 {dimension_numbers = #tpu.dot_dimension_numbers<[1], [0], [0], [1], [0, 0, 1, 1], [], []>} : vector<8x32xbf16>, vector<32x16xbf16>, vector<8x16xf32> -> vector<8x16xf32>
    %c0_21 = arith.constant 0 : index
    %c0_22 = arith.constant 0 : index
    %28 = vector.load %arg9[%c0_21, %c0_22] : memref<1x16xf32, #tpu.memory_space<vmem>>, vector<1x16xf32>
    %29 = vector.broadcast %28 : vector<1x16xf32> to vector<8x16xf32>
    %30 = arith.addf %27, %29 : vector<8x16xf32>
    %cst_23 = arith.constant 0.000000e+00 : f32
    %31 = vector.broadcast %cst_23 : f32 to vector<8x16xf32>
    %32 = arith.maximumf %30, %31 : vector<8x16xf32>
    %33 = arith.truncf %32 : vector<8x16xf32> to vector<8x16xbf16>
    %c0_24 = arith.constant 0 : index
    %c0_25 = arith.constant 0 : index
    %34 = vector.load %arg10[%c0_24, %c0_25] : memref<16x1xbf16, #tpu.memory_space<vmem>>, vector<16x1xbf16>
    %cst_26 = arith.constant dense<0.000000e+00> : vector<8x1xf32>
    %35 = tpu.matmul %33, %34, %cst_26 {dimension_numbers = #tpu.dot_dimension_numbers<[1], [0], [0], [1], [0, 0, 1, 1], [], []>} : vector<8x16xbf16>, vector<16x1xbf16>, vector<8x1xf32> -> vector<8x1xf32>
    %c0_27 = arith.constant 0 : index
    %c0_28 = arith.constant 0 : index
    %36 = vector.load %arg11[%c0_27, %c0_28] : memref<1x1xf32, #tpu.memory_space<vmem>>, vector<1x1xf32>
    %37 = vector.broadcast %36 : vector<1x1xf32> to vector<8x1xf32>
    %38 = arith.addf %35, %37 : vector<8x1xf32>
    %c0_29 = arith.constant 0 : index
    %c0_30 = arith.constant 0 : index
    %39 = vector.load %arg12[%c0_29, %c0_30] : memref<8x1xf32, #tpu.memory_space<vmem>>, vector<8x1xf32>
    tpu.vector_store %arg12[%c0_29, %c0_30], %38 {strides = array<i32>} : memref<8x1xf32, #tpu.memory_space<vmem>>, vector<8x1xf32>,
    return
  }
  func.func @transform_0(%arg0: i32) -> (i32, i32) {
    %c0_i32 = arith.constant 0 : i32
    %c0_i32_0 = arith.constant 0 : i32
    return %arg0, %c0_i32 : i32, i32
  }
  func.func @transform_1(%arg0: i32) -> (i32, i32) {
    %c0_i32 = arith.constant 0 : i32
    %c0_i32_0 = arith.constant 0 : i32
    %c0_i32_1 = arith.constant 0 : i32
    return %c0_i32, %c0_i32_0 : i32, i32
  }
  func.func @transform_2(%arg0: i32) -> (i32, i32) {
    %c0_i32 = arith.constant 0 : i32
    %c0_i32_0 = arith.constant 0 : i32
    %c0_i32_1 = arith.constant 0 : i32
    return %c0_i32, %c0_i32_0 : i32, i32
  }
  func.func @transform_3(%arg0: i32) -> (i32, i32) {
    %c0_i32 = arith.constant 0 : i32
    %c0_i32_0 = arith.constant 0 : i32
    %c0_i32_1 = arith.constant 0 : i32
    return %c0_i32, %c0_i32_0 : i32, i32
  }
  func.func @transform_4(%arg0: i32) -> (i32, i32) {
    %c0_i32 = arith.constant 0 : i32
    %c0_i32_0 = arith.constant 0 : i32
    %c0_i32_1 = arith.constant 0 : i32
    return %c0_i32, %c0_i32_0 : i32, i32
  }
  func.func @transform_5(%arg0: i32) -> (i32, i32) {
    %c0_i32 = arith.constant 0 : i32
    %c0_i32_0 = arith.constant 0 : i32
    %c0_i32_1 = arith.constant 0 : i32
    return %c0_i32, %c0_i32_0 : i32, i32
  }
  func.func @transform_6(%arg0: i32) -> (i32, i32) {
    %c0_i32 = arith.constant 0 : i32
    %c0_i32_0 = arith.constant 0 : i32
    %c0_i32_1 = arith.constant 0 : i32
    return %c0_i32, %c0_i32_0 : i32, i32
  }
  func.func @transform_7(%arg0: i32) -> (i32, i32) {
    %c0_i32 = arith.constant 0 : i32
    %c0_i32_0 = arith.constant 0 : i32
    %c0_i32_1 = arith.constant 0 : i32
    return %c0_i32, %c0_i32_0 : i32, i32
  }
  func.func @transform_8(%arg0: i32) -> (i32, i32) {
    %c0_i32 = arith.constant 0 : i32
    %c0_i32_0 = arith.constant 0 : i32
    %c0_i32_1 = arith.constant 0 : i32
    return %c0_i32, %c0_i32_0 : i32, i32
  }
  func.func @transform_9(%arg0: i32) -> (i32, i32) {
    %c0_i32 = arith.constant 0 : i32
    %c0_i32_0 = arith.constant 0 : i32
    %c0_i32_1 = arith.constant 0 : i32
    return %c0_i32, %c0_i32_0 : i32, i32
  }
  func.func @transform_10(%arg0: i32) -> (i32, i32) {
    %c0_i32 = arith.constant 0 : i32
    %c0_i32_0 = arith.constant 0 : i32
    %c0_i32_1 = arith.constant 0 : i32
    return %c0_i32, %c0_i32_0 : i32, i32
  }
  func.func @transform_11(%arg0: i32) -> (i32, i32) {
    %c0_i32 = arith.constant 0 : i32
    %c0_i32_0 = arith.constant 0 : i32
    return %arg0, %c0_i32 : i32, i32
  }
}

</mosaic_0001>

<llo_original>
// kernel: _net_forward_padded.1
$region0: #{_net_forward_padded.1}
  #allocation0 [shape = 'u32[]', space=smem, size = 0x4, offset = 0x4, fixed_abs, tag = 'smem constant byte address 0x4 - core index']
  #allocation1 [shape = 'u32[144,128]{1,0:T(1,128)}', space=vmem, size = 0x12000, scoped, tag = 'internal scratch']
  #allocation2 [shape = 'f32[1,1]{1,0:T(1,128)S(1)}', space=vmem, size = 0x200, scoped, tag = 'scoped memory for _net_forward_padded.1']
  %s0 = inlined_call_operand.vmem [shape: f32[8,30], index: 0, kind: input, shape index: {}]
  %s1 = inlined_call_operand.vmem [shape: bf16[30,128], index: 1, kind: input, shape index: {}]
  %s2 = inlined_call_operand.vmem [shape: f32[1,128], index: 2, kind: input, shape index: {}]
  %s3 = inlined_call_operand.vmem [shape: bf16[128,64], index: 3, kind: input, shape index: {}]
  %s4 = inlined_call_operand.vmem [shape: f32[1,64], index: 4, kind: input, shape index: {}]
  %s5 = inlined_call_operand.vmem [shape: bf16[64,32], index: 5, kind: input, shape index: {}]
  %s6 = inlined_call_operand.vmem [shape: f32[1,32], index: 6, kind: input, shape index: {}]
  %s7 = inlined_call_operand.vmem [shape: bf16[32,16], index: 7, kind: input, shape index: {}]
  %s8 = inlined_call_operand.vmem [shape: f32[1,16], index: 8, kind: input, shape index: {}]
  %s9 = inlined_call_operand.vmem [shape: bf16[16,1], index: 9, kind: input, shape index: {}]
  %s10 = inlined_call_operand.<no memory space> [shape: f32[1,1], index: 10, kind: input, shape index: {}]
  %s11 = inlined_call_operand.vmem [shape: f32[8,1], index: 11, kind: output, shape index: {}]
  %s12 = sld [smem:[#allocation0]]
  $region54: #{_net_forward_padded.1} parent=0
    _
  %s14 = ssub.s32 1, %s12
  %s15 = scalar_select 0, %s14, %s12
  %v16 = vstv %s10
  %17 = vst [vmem:[#allocation2] sm:$0x1] %v16
  // Predicated region
  $region2: #{_net_forward_padded.1} parent=0 // pred_check
    _
  $region3: #{_net_forward_padded.1} parent=0 // pred_check_branch
    %19 = sbr.rel (0) target = $region5
  $region4: #{_net_forward_padded.1} parent=0 // pred_region
    _
  $region5: #{_net_forward_padded.1} parent=0 // pred_fallthru
    _
  // Predicated region
  $region6: #{_net_forward_padded.1} parent=0 // pred_check
    _
  $region7: #{_net_forward_padded.1} parent=0 // pred_check_branch
    %21 = sbr.rel (0) target = $region9
  $region8: #{_net_forward_padded.1} parent=0 // pred_region
    _
  $region9: #{_net_forward_padded.1} parent=0 // pred_fallthru
    _
  // Predicated region
  $region10: #{_net_forward_padded.1} parent=0 // pred_check
    _
  $region11: #{_net_forward_padded.1} parent=0 // pred_check_branch
    %23 = sbr.rel (0) target = $region13
  $region12: #{_net_forward_padded.1} parent=0 // pred_region
    _
  $region13: #{_net_forward_padded.1} parent=0 // pred_fallthru
    _
  // Predicated region
  $region14: #{_net_forward_padded.1} parent=0 // pred_check
    _
  $region15: #{_net_forward_padded.1} parent=0 // pred_check_branch
    %25 = sbr.rel (0) target = $region17
  $region16: #{_net_forward_padded.1} parent=0 // pred_region
    _
  $region17: #{_net_forward_padded.1} parent=0 // pred_fallthru
    _
  // Predicated region
  $region18: #{_net_forward_padded.1} parent=0 // pred_check
    _
  $region19: #{_net_forward_padded.1} parent=0 // pred_check_branch
    %27 = sbr.rel (0) target = $region21
  $region20: #{_net_forward_padded.1} parent=0 // pred_region
    _
  $region21: #{_net_forward_padded.1} parent=0 // pred_fallthru
    _
  // Predicated region
  $region22: #{_net_forward_padded.1} parent=0 // pred_check
    _
  $region23: #{_net_forward_padded.1} parent=0 // pred_check_branch
    %29 = sbr.rel (0) target = $region25
  $region24: #{_net_forward_padded.1} parent=0 // pred_region
    _
  $region25: #{_net_forward_padded.1} parent=0 // pred_fallthru
    _
  // Predicated region
  $region26: #{_net_forward_padded.1} parent=0 // pred_check
    _
  $region27: #{_net_forward_padded.1} parent=0 // pred_check_branch
    %31 = sbr.rel (0) target = $region29
  $region28: #{_net_forward_padded.1} parent=0 // pred_region
    _
  $region29: #{_net_forward_padded.1} parent=0 // pred_fallthru
    _
  // Predicated region
  $region30: #{_net_forward_padded.1} parent=0 // pred_check
    _
  $region31: #{_net_forward_padded.1} parent=0 // pred_check_branch
    %33 = sbr.rel (0) target = $region33
  $region32: #{_net_forward_padded.1} parent=0 // pred_region
    _
  $region33: #{_net_forward_padded.1} parent=0 // pred_fallthru
    _
  // Predicated region
  $region34: #{_net_forward_padded.1} parent=0 // pred_check
    _
  $region35: #{_net_forward_padded.1} parent=0 // pred_check_branch
    %35 = sbr.rel (0) target = $region37
  $region36: #{_net_forward_padded.1} parent=0 // pred_region
    _
  $region37: #{_net_forward_padded.1} parent=0 // pred_fallthru
    _
  // Predicated region
  $region38: #{_net_forward_padded.1} parent=0 // pred_check
    _
  $region39: #{_net_forward_padded.1} parent=0 // pred_check_branch
    %37 = sbr.rel (0) target = $region41
  $region40: #{_net_forward_padded.1} parent=0 // pred_region
    _
  $region41: #{_net_forward_padded.1} parent=0 // pred_fallthru
    _
  // Predicated region
  $region42: #{_net_forward_padded.1} parent=0 // pred_check
    _
  $region43: #{_net_forward_padded.1} parent=0 // pred_check_branch
    %39 = sbr.rel (0) target = $region45
  $region44: #{_net_forward_padded.1} parent=0 // pred_region
    _
  $region45: #{_net_forward_padded.1} parent=0 // pred_fallthru
    _
  %v41 = vld [vmem:[%s0] sm:$0xff]
  %v42 = vpack.c.bf16 %v41, %v41
  %v43 = vld [vmem:[%s1] sm:$0xf]
  %v44 = vld [vmem:[%s1 + $0x4] sm:$0xf]
  %v45 = vld [vmem:[%s1 + $0x8] sm:$0xf]
  %v46 = vld [vmem:[%s1 + $0xc] sm:$0x7]
  %v47 = vld [vmem:[%s2] sm:$0x1]
  %v49 = vlaneseq
  %v50 = vshrl.u32 %v49, 7
  %v51 = vsub.s32 0, %v50
  %v52 = vrot.slane %v47, %v51
  %v58 = vunpack.c.l.b16 %v43
  %v59 = vunpack.c.l.b16 %v44
  %v60 = vunpack.c.l.b16 %v45
  %v61 = vunpack.c.l.b16 %v46
  %v62 = vpack.c.b16 %v59, %v58
  %v63 = vpack.c.b16 %v61, %v60
  %vm65 = vcmask 244736
  %v67 = vsel %vm65, %v42, 0
  %vm69 = vcmask 1046528
  %v71 = vsel %vm69, %v63, 0
  %73 = vmatprep.subr.bf16.mxu0 0
  %74 = vmatpush1.bf16.msra.mxu0 0
  %75 = vmatprep.subr.bf16.mxu0 0
  %76 = vmatpush1.bf16.msra.mxu0 0
  %77 = vmatprep.subr.bf16.mxu0 0
  %78 = vmatpush1.bf16.msra.mxu0 0
  %79 = vmatprep.subr.bf16.mxu0 0
  %80 = vmatpush1.bf16.msra.mxu0 0
  %81 = vmatprep.subr.bf16.mxu0 0
  %82 = vmatpush1.bf16.msra.mxu0 0
  %83 = vmatprep.subr.bf16.mxu0 0
  %84 = vmatpush1.bf16.msra.mxu0 0
  %85 = vmatprep.subr.bf16.mxu0 0
  %86 = vmatpush1.bf16.msra.mxu0 %v71
  %87 = vmatprep.subr.bf16.mxu0 0
  %88 = vmatpush1.bf16.msra.mxu0 %v62
  %89 = vmatprep.subr.bf16.mxu0 0
  %90 = vmatpush2.bf16.msra.mxu0 0
  %91 = vmatprep.subr.bf16.mxu0 0
  %92 = vmatpush2.bf16.msra.mxu0 0
  %93 = vmatprep.subr.bf16.mxu0 0
  %94 = vmatpush2.bf16.msra.mxu0 0
  %95 = vmatprep.subr.bf16.mxu0 0
  %96 = vmatpush2.bf16.msra.mxu0 0
  %97 = vmatprep.subr.bf16.mxu0 0
  %98 = vmatpush2.bf16.msra.mxu0 0
  %99 = vmatprep.subr.bf16.mxu0 0
  %100 = vmatpush2.bf16.msra.mxu0 0
  %101 = vmatprep.subr.bf16.mxu0 0
  %102 = vmatpush2.bf16.msra.mxu0 0
  %103 = vmatprep.subr.bf16.mxu0 0
  %104 = vmatpush2.bf16.msra.mxu0 0
  %105 = vmatprep.mubr.bf16.mxu0 0
  %106 = vmatmul.mubr.bf16.gmra.mxu0 %v67
  %v107 = vpop.f32.mrf.mxu0
  %v108 = vadd.f32 %v52, %v107
  %v109 = vpop.f32.mrf.mxu0
  %v110 = vpop.f32.mrf.mxu0
  %v111 = vpop.f32.mrf.mxu0
  %112 = vdwg.mxu0
  %v113 = vmax.f32 %v108, 0.0
  %v114 = vpack.c.bf16 %v113, %v113
  %v115 = vld [vmem:[%s3] sm:$0xf]
  %v116 = vld [vmem:[%s3 + $0x4] sm:$0xf]
  %v117 = vld [vmem:[%s3 + $0x8] sm:$0xf]
  %v118 = vld [vmem:[%s3 + $0xc] sm:$0xf]
  %v119 = vld [vmem:[%s3 + $0x10] sm:$0xf]
  %v120 = vld [vmem:[%s3 + $0x14] sm:$0xf]
  %v121 = vld [vmem:[%s3 + $0x18] sm:$0xf]
  %v122 = vld [vmem:[%s3 + $0x1c] sm:$0xf]
  %v123 = vld [vmem:[%s3 + $0x20] sm:$0xf]
  %v124 = vld [vmem:[%s3 + $0x24] sm:$0xf]
  %v125 = vld [vmem:[%s3 + $0x28] sm:$0xf]
  %v126 = vld [vmem:[%s3 + $0x2c] sm:$0xf]
  %v127 = vld [vmem:[%s3 + $0x30] sm:$0xf]
  %v128 = vld [vmem:[%s3 + $0x34] sm:$0xf]
  %v129 = vld [vmem:[%s3 + $0x38] sm:$0xf]
  %v130 = vld [vmem:[%s3 + $0x3c] sm:$0xf]
  %v131 = vld [vmem:[%s4] sm:$0x1]
  %v133 = vlaneseq
  %v134 = vshrl.u32 %v133, 7
  %v135 = vsub.s32 0, %v134
  %v136 = vrot.slane %v131, %v135
  %v154 = vunpack.c.l.b16 %v115
  %v155 = vunpack.c.l.b16 %v116
  %v156 = vunpack.c.l.b16 %v117
  %v157 = vunpack.c.l.b16 %v118
  %v158 = vunpack.c.l.b16 %v119
  %v159 = vunpack.c.l.b16 %v120
  %v160 = vunpack.c.l.b16 %v121
  %v161 = vunpack.c.l.b16 %v122
  %v162 = vunpack.c.l.b16 %v123
  %v163 = vunpack.c.l.b16 %v124
  %v164 = vunpack.c.l.b16 %v125
  %v165 = vunpack.c.l.b16 %v126
  %v166 = vunpack.c.l.b16 %v127
  %v167 = vunpack.c.l.b16 %v128
  %v168 = vunpack.c.l.b16 %v129
  %v169 = vunpack.c.l.b16 %v130
  %v170 = vpack.c.b16 %v155, %v154
  %v171 = vpack.c.b16 %v157, %v156
  %v172 = vpack.c.b16 %v159, %v158
  %v173 = vpack.c.b16 %v161, %v160
  %v174 = vpack.c.b16 %v163, %v162
  %v175 = vpack.c.b16 %v165, %v164
  %v176 = vpack.c.b16 %v167, %v166
  %v177 = vpack.c.b16 %v169, %v168
  %186 = vmatprep.subr.bf16.mxu0 0
  %187 = vmatpush1.bf16.msra.mxu0 %v177
  %188 = vmatprep.subr.bf16.mxu0 0
  %189 = vmatpush1.bf16.msra.mxu0 %v176
  %190 = vmatprep.subr.bf16.mxu0 0
  %191 = vmatpush1.bf16.msra.mxu0 %v175
  %192 = vmatprep.subr.bf16.mxu0 0
  %193 = vmatpush1.bf16.msra.mxu0 %v174
  %194 = vmatprep.subr.bf16.mxu0 0
  %195 = vmatpush1.bf16.msra.mxu0 %v173
  %196 = vmatprep.subr.bf16.mxu0 0
  %197 = vmatpush1.bf16.msra.mxu0 %v172
  %198 = vmatprep.subr.bf16.mxu0 0
  %199 = vmatpush1.bf16.msra.mxu0 %v171
  %200 = vmatprep.subr.bf16.mxu0 0
  %201 = vmatpush1.bf16.msra.mxu0 %v170
  %202 = vmatprep.subr.bf16.mxu0 0
  %203 = vmatpush2.bf16.msra.mxu0 0
  %204 = vmatprep.subr.bf16.mxu0 0
  %205 = vmatpush2.bf16.msra.mxu0 0
  %206 = vmatprep.subr.bf16.mxu0 0
  %207 = vmatpush2.bf16.msra.mxu0 0
  %208 = vmatprep.subr.bf16.mxu0 0
  %209 = vmatpush2.bf16.msra.mxu0 0
  %210 = vmatprep.subr.bf16.mxu0 0
  %211 = vmatpush2.bf16.msra.mxu0 0
  %212 = vmatprep.subr.bf16.mxu0 0
  %213 = vmatpush2.bf16.msra.mxu0 0
  %214 = vmatprep.subr.bf16.mxu0 0
  %215 = vmatpush2.bf16.msra.mxu0 0
  %216 = vmatprep.subr.bf16.mxu0 0
  %217 = vmatpush2.bf16.msra.mxu0 0
  %218 = vmatprep.mubr.bf16.mxu0 0
  %219 = vmatmul.mubr.bf16.gmra.mxu0 %v114
  %v220 = vpop.f32.mrf.mxu0
  %v221 = vadd.f32 %v136, %v220
  %v222 = vpop.f32.mrf.mxu0
  %v223 = vpop.f32.mrf.mxu0
  %v224 = vpop.f32.mrf.mxu0
  %225 = vdwg.mxu0
  %v226 = vmax.f32 %v221, 0.0
  %v227 = vpack.c.bf16 %v226, %v226
  %v228 = vld [vmem:[%s5] sm:$0xf]
  %v229 = vld [vmem:[%s5 + $0x4] sm:$0xf]
  %v230 = vld [vmem:[%s5 + $0x8] sm:$0xf]
  %v231 = vld [vmem:[%s5 + $0xc] sm:$0xf]
  %v232 = vld [vmem:[%s5 + $0x10] sm:$0xf]
  %v233 = vld [vmem:[%s5 + $0x14] sm:$0xf]
  %v234 = vld [vmem:[%s5 + $0x18] sm:$0xf]
  %v235 = vld [vmem:[%s5 + $0x1c] sm:$0xf]
  %v236 = vld [vmem:[%s6] sm:$0x1]
  %v238 = vlaneseq
  %v239 = vshrl.u32 %v238, 7
  %v240 = vsub.s32 0, %v239
  %v241 = vrot.slane %v236, %v240
  %v251 = vunpack.c.l.b16 %v228
  %v252 = vunpack.c.l.b16 %v229
  %v253 = vunpack.c.l.b16 %v230
  %v254 = vunpack.c.l.b16 %v231
  %v255 = vunpack.c.l.b16 %v232
  %v256 = vunpack.c.l.b16 %v233
  %v257 = vunpack.c.l.b16 %v234
  %v258 = vunpack.c.l.b16 %v235
  %v259 = vpack.c.b16 %v252, %v251
  %v260 = vpack.c.b16 %v254, %v253
  %v261 = vpack.c.b16 %v256, %v255
  %v262 = vpack.c.b16 %v258, %v257
  %vm267 = vcmask 523264
  %v269 = vsel %vm267, %v227, 0
  %271 = vmatprep.subr.bf16.mxu0 0
  %272 = vmatpush1.bf16.msra.mxu0 0
  %273 = vmatprep.subr.bf16.mxu0 0
  %274 = vmatpush1.bf16.msra.mxu0 0
  %275 = vmatprep.subr.bf16.mxu0 0
  %276 = vmatpush1.bf16.msra.mxu0 0
  %277 = vmatprep.subr.bf16.mxu0 0
  %278 = vmatpush1.bf16.msra.mxu0 0
  %279 = vmatprep.subr.bf16.mxu0 0
  %280 = vmatpush1.bf16.msra.mxu0 %v262
  %281 = vmatprep.subr.bf16.mxu0 0
  %282 = vmatpush1.bf16.msra.mxu0 %v261
  %283 = vmatprep.subr.bf16.mxu0 0
  %284 = vmatpush1.bf16.msra.mxu0 %v260
  %285 = vmatprep.subr.bf16.mxu0 0
  %286 = vmatpush1.bf16.msra.mxu0 %v259
  %287 = vmatprep.subr.bf16.mxu0 0
  %288 = vmatpush2.bf16.msra.mxu0 0
  %289 = vmatprep.subr.bf16.mxu0 0
  %290 = vmatpush2.bf16.msra.mxu0 0
  %291 = vmatprep.subr.bf16.mxu0 0
  %292 = vmatpush2.bf16.msra.mxu0 0
  %293 = vmatprep.subr.bf16.mxu0 0
  %294 = vmatpush2.bf16.msra.mxu0 0
  %295 = vmatprep.subr.bf16.mxu0 0
  %296 = vmatpush2.bf16.msra.mxu0 0
  %297 = vmatprep.subr.bf16.mxu0 0
  %298 = vmatpush2.bf16.msra.mxu0 0
  %299 = vmatprep.subr.bf16.mxu0 0
  %300 = vmatpush2.bf16.msra.mxu0 0
  %301 = vmatprep.subr.bf16.mxu0 0
  %302 = vmatpush2.bf16.msra.mxu0 0
  %303 = vmatprep.mubr.bf16.mxu0 0
  %304 = vmatmul.mubr.bf16.gmra.mxu0 %v269
  %v305 = vpop.f32.mrf.mxu0
  %v306 = vadd.f32 %v241, %v305
  %v307 = vpop.f32.mrf.mxu0
  %v308 = vpop.f32.mrf.mxu0
  %v309 = vpop.f32.mrf.mxu0
  %310 = vdwg.mxu0
  %v311 = vmax.f32 %v306, 0.0
  %v312 = vpack.c.bf16 %v311, %v311
  %v313 = vld [vmem:[%s7] sm:$0xf]
  %v314 = vld [vmem:[%s7 + $0x4] sm:$0xf]
  %v315 = vld [vmem:[%s7 + $0x8] sm:$0xf]
  %v316 = vld [vmem:[%s7 + $0xc] sm:$0xf]
  %v317 = vld [vmem:[%s8] sm:$0x1]
  %v319 = vlaneseq
  %v320 = vshrl.u32 %v319, 7
  %v321 = vsub.s32 0, %v320
  %v322 = vrot.slane %v317, %v321
  %v328 = vunpack.c.l.b16 %v313
  %v329 = vunpack.c.l.b16 %v314
  %v330 = vunpack.c.l.b16 %v315
  %v331 = vunpack.c.l.b16 %v316
  %v332 = vpack.c.b16 %v329, %v328
  %v333 = vpack.c.b16 %v331, %v330
  %vm336 = vcmask 261120
  %v338 = vsel %vm336, %v312, 0
  %340 = vmatprep.subr.bf16.mxu0 0
  %341 = vmatpush1.bf16.msra.mxu0 0
  %342 = vmatprep.subr.bf16.mxu0 0
  %343 = vmatpush1.bf16.msra.mxu0 0
  %344 = vmatprep.subr.bf16.mxu0 0
  %345 = vmatpush1.bf16.msra.mxu0 0
  %346 = vmatprep.subr.bf16.mxu0 0
  %347 = vmatpush1.bf16.msra.mxu0 0
  %348 = vmatprep.subr.bf16.mxu0 0
  %349 = vmatpush1.bf16.msra.mxu0 0
  %350 = vmatprep.subr.bf16.mxu0 0
  %351 = vmatpush1.bf16.msra.mxu0 0
  %352 = vmatprep.subr.bf16.mxu0 0
  %353 = vmatpush1.bf16.msra.mxu0 %v333
  %354 = vmatprep.subr.bf16.mxu0 0
  %355 = vmatpush1.bf16.msra.mxu0 %v332
  %356 = vmatprep.subr.bf16.mxu0 0
  %357 = vmatpush2.bf16.msra.mxu0 0
  %358 = vmatprep.subr.bf16.mxu0 0
  %359 = vmatpush2.bf16.msra.mxu0 0
  %360 = vmatprep.subr.bf16.mxu0 0
  %361 = vmatpush2.bf16.msra.mxu0 0
  %362 = vmatprep.subr.bf16.mxu0 0
  %363 = vmatpush2.bf16.msra.mxu0 0
  %364 = vmatprep.subr.bf16.mxu0 0
  %365 = vmatpush2.bf16.msra.mxu0 0
  %366 = vmatprep.subr.bf16.mxu0 0
  %367 = vmatpush2.bf16.msra.mxu0 0
  %368 = vmatprep.subr.bf16.mxu0 0
  %369 = vmatpush2.bf16.msra.mxu0 0
  %370 = vmatprep.subr.bf16.mxu0 0
  %371 = vmatpush2.bf16.msra.mxu0 0
  %372 = vmatprep.mubr.bf16.mxu0 0
  %373 = vmatmul.mubr.bf16.gmra.mxu0 %v338
  %v374 = vpop.f32.mrf.mxu0
  %v375 = vadd.f32 %v322, %v374
  %v376 = vpop.f32.mrf.mxu0
  %v377 = vpop.f32.mrf.mxu0
  %v378 = vpop.f32.mrf.mxu0
  %379 = vdwg.mxu0
  %v380 = vmax.f32 %v375, 0.0
  %v381 = vpack.c.bf16 %v380, %v380
  %v382 = vld [vmem:[%s9] sm:$0xf]
  %v383 = vld [vmem:[%s9 + $0x4] sm:$0xf]
  %v384 = vld [vmem:[#allocation2] sm:$0x1]
  %v386 = vlaneseq
  %v387 = vshrl.u32 %v386, 7
  %v388 = vsub.s32 0, %v387
  %v389 = vrot.slane %v384, %v388
  %v393 = vunpack.c.l.b16 %v382
  %v394 = vunpack.c.l.b16 %v383
  %v395 = vpack.c.b16 %v394, %v393
  %vm397 = vcmask 130048
  %v399 = vsel %vm397, %v381, 0
  %401 = vmatprep.subr.bf16.mxu0 0
  %402 = vmatpush1.bf16.msra.mxu0 0
  %403 = vmatprep.subr.bf16.mxu0 0
  %404 = vmatpush1.bf16.msra.mxu0 0
  %405 = vmatprep.subr.bf16.mxu0 0
  %406 = vmatpush1.bf16.msra.mxu0 0
  %407 = vmatprep.subr.bf16.mxu0 0
  %408 = vmatpush1.bf16.msra.mxu0 0
  %409 = vmatprep.subr.bf16.mxu0 0
  %410 = vmatpush1.bf16.msra.mxu0 0
  %411 = vmatprep.subr.bf16.mxu0 0
  %412 = vmatpush1.bf16.msra.mxu0 0
  %413 = vmatprep.subr.bf16.mxu0 0
  %414 = vmatpush1.bf16.msra.mxu0 0
  %415 = vmatprep.subr.bf16.mxu0 0
  %416 = vmatpush1.bf16.msra.mxu0 %v395
  %417 = vmatprep.subr.bf16.mxu0 0
  %418 = vmatpush2.bf16.msra.mxu0 0
  %419 = vmatprep.subr.bf16.mxu0 0
  %420 = vmatpush2.bf16.msra.mxu0 0
  %421 = vmatprep.subr.bf16.mxu0 0
  %422 = vmatpush2.bf16.msra.mxu0 0
  %423 = vmatprep.subr.bf16.mxu0 0
  %424 = vmatpush2.bf16.msra.mxu0 0
  %425 = vmatprep.subr.bf16.mxu0 0
  %426 = vmatpush2.bf16.msra.mxu0 0
  %427 = vmatprep.subr.bf16.mxu0 0
  %428 = vmatpush2.bf16.msra.mxu0 0
  %429 = vmatprep.subr.bf16.mxu0 0
  %430 = vmatpush2.bf16.msra.mxu0 0
  %431 = vmatprep.subr.bf16.mxu0 0
  %432 = vmatpush2.bf16.msra.mxu0 0
  %433 = vmatprep.mubr.bf16.mxu0 0
  %434 = vmatmul.mubr.bf16.gmra.mxu0 %v399
  %v435 = vpop.f32.mrf.mxu0
  %v436 = vadd.f32 %v389, %v435
  %v437 = vpop.f32.mrf.mxu0
  %v438 = vpop.f32.mrf.mxu0
  %v439 = vpop.f32.mrf.mxu0
  %440 = vdwg.mxu0
  %vm441 = vcmask 7168
  %442 = vst.msk [vmem:[%s11] sm:$0xff] %vm441, %v436
  // Predicated region
  $region46: #{_net_forward_padded.1} parent=0 // pred_check
    _
  $region47: #{_net_forward_padded.1} parent=0 // pred_check_branch
    %444 = sbr.rel (0) target = $region49
  $region48: #{_net_forward_padded.1} parent=0 // pred_region
    _
  $region49: #{_net_forward_padded.1} parent=0 // pred_fallthru
    _
  // Predicated region
  $region50: #{_net_forward_padded.1} parent=0 // pred_check
    _
  $region51: #{_net_forward_padded.1} parent=0 // pred_check_branch
    %446 = sbr.rel (0) target = $region53
  $region52: #{_net_forward_padded.1} parent=0 // pred_region
    _
  $region53: #{_net_forward_padded.1} parent=0 // pred_fallthru
    _

</llo_original>
